<compile_context>
chip_gen: v7x
topology: tpu7x:2x2x1
jax: 0.10.0
libtpu: 0.0.40
codegen_flags: <defaults>
</compile_context>

<pallas_src>
import functools

import jax
import jax.numpy as jnp
from jax import lax
from jax.experimental import pallas as pl
from jax.experimental.pallas import tpu as pltpu


def _additive_attn_kernel(vl_ref,            # scalar prefetch: (B,) int32 (SMEM)
                          q_ref,             # (1, Q, Dq)   VMEM
                          kt_ref,            # (1, Dk, tK)  VMEM (keys pre-transposed)
                          v_ref,             # (1, tK, Dv)  VMEM
                          wq_ref,            # (Dq, H)      VMEM
                          wkt_ref,           # (H, Dk)      VMEM (W_k transposed)
                          wv_ref,            # (1, H)       SMEM (scalar reads)
                          out_ref,           # (1, Q, Dv)
                          qh_scr,            # (Q, H)  f32 scratch
                          m_scr,             # (Q, 1)  f32 scratch
                          l_scr,             # (Q, 1)  f32 scratch
                          acc_scr,           # (Q, Dv) f32 scratch
                          *, K, tK):
    b = pl.program_id(0)
    kv = pl.program_id(1)
    n_kv = pl.num_programs(1)

    Q, H = qh_scr.shape
    Dv = acc_scr.shape[-1]

    @pl.when(kv == 0)
    def _init():
        # Query projection is computed once per batch element and cached.
        qh_scr[...] = jnp.dot(q_ref[0], wq_ref[...],
                              preferred_element_type=jnp.float32)
        m_scr[...] = jnp.full_like(m_scr, -jnp.inf)
        l_scr[...] = jnp.zeros_like(l_scr)
        acc_scr[...] = jnp.zeros_like(acc_scr)

    # khT: (H, tK) = W_k^T @ keys^T chunk -- single MXU matmul, no transposes.
    khT = jnp.dot(wkt_ref[...], kt_ref[0], preferred_element_type=jnp.float32)

    qh = qh_scr[...]                                       # (Q, H)

    # scores[q, k] = sum_h w_v[h] * tanh(qh[q, h] + kh[k, h])
    # H-accumulation over a lane-dense (Q, tK) tile; no 3-D intermediate.
    # H is small and static -> unrolled Python loop; w_v[h] is an SMEM scalar.
    scores = jnp.zeros((Q, tK), jnp.float32)
    for h in range(H):
        scores = scores + wv_ref[0, h] * jnp.tanh(qh[:, h:h + 1] + khT[h:h + 1, :])

    # Masked online softmax (flash-style) over the key axis.
    vl = vl_ref[b]
    kbase = kv * tK
    kidx = kbase + lax.broadcasted_iota(jnp.int32, (Q, tK), 1)
    masked = jnp.where(kidx < vl, scores, jnp.float32(-1e6))

    m_prev = m_scr[...]
    m_new = jnp.maximum(m_prev, jnp.max(masked, axis=-1, keepdims=True))
    alpha = jnp.exp(m_prev - m_new)
    p = jnp.exp(masked - m_new)                            # (Q, tK)

    v_blk = v_ref[0]                                       # (tK, Dv)
    if K % tK != 0:                                        # static: ragged last chunk
        p = jnp.where(kidx < K, p, 0.0)
        ridx = kbase + lax.broadcasted_iota(jnp.int32, (tK, Dv), 0)
        v_blk = jnp.where(ridx < K, v_blk, 0.0)

    l_scr[...] = alpha * l_scr[...] + jnp.sum(p, axis=-1, keepdims=True)
    acc_scr[...] = alpha * acc_scr[...] + jnp.dot(
        p.astype(v_blk.dtype), v_blk, preferred_element_type=jnp.float32)
    m_scr[...] = m_new

    @pl.when(kv == n_kv - 1)
    def _finalize():
        inv_l = pl.reciprocal(l_scr[...], approx=True)
        out_ref[0] = (acc_scr[...] * inv_l).astype(out_ref.dtype)


def additive_attention(queries, keys, values, valid_lens, W_q, W_k, w_v,
                       *, max_tk=512):
    """queries (B,Q,Dq), keys (B,K,Dk), values (B,K,Dv), valid_lens (B,) int.
    W_q: (Dq,H), W_k: (Dk,H), w_v: (1,H).  Returns (B,Q,Dv) float32."""
    B, Q, Dq = queries.shape
    _, K, Dk = keys.shape
    _, _, Dv = values.shape
    H = W_q.shape[1]

    tK = min(K, max_tk)              # key-chunk size; VMEM use independent of K
    nK = pl.cdiv(K, tK)

    # Layout plumbing outside the kernel: keys as (B, Dk, K) and W_k as (H, Dk)
    # so the kernel computes khT directly without any in-kernel transpose.
    keys_t = jnp.swapaxes(keys, 1, 2)
    W_k_t = W_k.T
    valid_lens = valid_lens.astype(jnp.int32)

    grid_spec = pltpu.PrefetchScalarGridSpec(
        num_scalar_prefetch=1,
        grid=(B, nK),
        in_specs=[
            pl.BlockSpec((1, Q, Dq), lambda b, kv, vl: (b, 0, 0)),
            pl.BlockSpec((1, Dk, tK), lambda b, kv, vl: (b, 0, kv)),
            pl.BlockSpec((1, tK, Dv), lambda b, kv, vl: (b, kv, 0)),
            pl.BlockSpec((Dq, H), lambda b, kv, vl: (0, 0)),
            pl.BlockSpec((H, Dk), lambda b, kv, vl: (0, 0)),
            pl.BlockSpec(memory_space=pltpu.MemorySpace.SMEM),   # w_v scalars
        ],
        out_specs=pl.BlockSpec((1, Q, Dv), lambda b, kv, vl: (b, 0, 0)),
        scratch_shapes=[
            pltpu.VMEM((Q, H), jnp.float32),    # cached query projection
            pltpu.VMEM((Q, 1), jnp.float32),    # online-softmax m
            pltpu.VMEM((Q, 1), jnp.float32),    # online-softmax l
            pltpu.VMEM((Q, Dv), jnp.float32),   # output accumulator
        ],
    )

    kernel = functools.partial(_additive_attn_kernel, K=K, tK=tK)

    return pl.pallas_call(
        kernel,
        out_shape=jax.ShapeDtypeStruct((B, Q, Dv), jnp.float32),
        grid_spec=grid_spec,
        compiler_params=pltpu.CompilerParams(
            dimension_semantics=("parallel", "arbitrary"),
            vmem_limit_bytes=48 * 1024 * 1024,
        ),
    )(valid_lens, queries, keys_t, values, W_q, W_k_t, w_v)


def _reference(queries, keys, values, valid_lens, W_q, W_k, w_v):
    qh = queries @ W_q                       # (B, Q, H)
    kh = keys @ W_k                          # (B, K, H)
    feat = jnp.tanh(qh[:, :, None, :] + kh[:, None, :, :])
    scores = jnp.einsum("bqkh,h->bqk", feat, w_v[0])
    kidx = jnp.arange(scores.shape[-1])[None, None, :]
    masked = jnp.where(kidx < valid_lens[:, None, None], scores, -1e6)
    attn = jax.nn.softmax(masked, axis=-1)
    return attn @ values


if __name__ == "__main__":
    # Shapes consistent with the module's example usage:
    #   queries (2, 1, 2), keys (2, 10, 2), values (2, 10, 4), valid_lens (2,)
    B, Q, K = 2, 1, 10
    query_size, key_size, num_hiddens, value_size = 2, 2, 8, 4

    key = jax.random.PRNGKey(0)
    kq, kk, kv_w, kqr = jax.random.split(key, 4)

    # nn.Linear weights without bias, stored pre-transposed so x @ W matches
    # PyTorch's x @ weight.T.
    W_q = jax.random.normal(kq, (query_size, num_hiddens), jnp.float32) * 0.1
    W_k = jax.random.normal(kk, (key_size, num_hiddens), jnp.float32) * 0.1
    w_v = jax.random.normal(kv_w, (1, num_hiddens), jnp.float32) * 0.1

    queries = jax.random.normal(kqr, (B, Q, query_size), jnp.float32)
    keys_in = jnp.ones((B, K, key_size), jnp.float32)
    values = jnp.tile(
        jnp.arange(K * value_size, dtype=jnp.float32).reshape(1, K, value_size),
        (B, 1, 1))
    valid_lens = jnp.array([2, 6], dtype=jnp.int32)

    out = additive_attention(queries, keys_in, values, valid_lens, W_q, W_k, w_v)
    out = jax.block_until_ready(out)

    ref = _reference(queries, keys_in, values, valid_lens, W_q, W_k, w_v)
    assert out.shape == (B, Q, value_size)
    # Tolerance accounts for the approximate-reciprocal softmax normalization.
    assert jnp.allclose(out, ref, atol=1e-2, rtol=1e-2), (out, ref)

    print("KERNEL_OK")
</pallas_src>

<mosaic_0001>
module attributes {stable_mosaic.version = 11 : i64} {
  func.func @_additive_attn_kernel(%arg0: i32, %arg1: i32, %arg2: memref<2xi32, #tpu.memory_space<smem>>, %arg3: memref<1x1x2xf32, #tpu.memory_space<vmem>>, %arg4: memref<1x2x10xf32, #tpu.memory_space<vmem>>, %arg5: memref<1x10x4xf32, #tpu.memory_space<vmem>>, %arg6: memref<2x8xf32, #tpu.memory_space<vmem>>, %arg7: memref<8x2xf32, #tpu.memory_space<vmem>>, %arg8: memref<1x8xf32, #tpu.memory_space<smem>>, %arg9: memref<1x1x4xf32, #tpu.memory_space<vmem>>, %arg10: memref<1x8xf32, #tpu.memory_space<vmem>>, %arg11: memref<1x1xf32, #tpu.memory_space<vmem>>, %arg12: memref<1x1xf32, #tpu.memory_space<vmem>>, %arg13: memref<1x4xf32, #tpu.memory_space<vmem>>) attributes {dimension_semantics = [#tpu.dimension_semantics<parallel>, #tpu.dimension_semantics<arbitrary>], iteration_bounds = array<i64: 2, 1>, scalar_prefetch = 1 : i64, scratch_operands = 4 : i64, tpu.core_type = #tpu.core_type<tc>, window_params = [{transform_indices = @transform_0, window_bounds = array<i64: 1, 1, 2>}, {transform_indices = @transform_1, window_bounds = array<i64: 1, 2, 10>}, {transform_indices = @transform_2, window_bounds = array<i64: 1, 10, 4>}, {pipeline_mode = #tpu.pipeline_mode<synchronous>, transform_indices = @transform_3, window_bounds = array<i64: 2, 8>}, {pipeline_mode = #tpu.pipeline_mode<synchronous>, transform_indices = @transform_4, window_bounds = array<i64: 8, 2>}, {transform_indices = @transform_5, window_bounds = array<i64: 1, 8>}, {transform_indices = @transform_6, window_bounds = array<i64: 1, 1, 4>}]} {
    %c0_i32 = arith.constant 0 : i32
    %0 = arith.cmpi eq, %arg1, %c0_i32 : i32
    %1 = arith.extui %0 : i1 to i32
    %c0_i32_0 = arith.constant 0 : i32
    %2 = arith.cmpi ne, %1, %c0_i32_0 : i32
    scf.if %2 {
      %c0_38 = arith.constant 0 : index
      %c0_39 = arith.constant 0 : index
      %c0_40 = arith.constant 0 : index
      %118 = vector.load %arg3[%c0_38, %c0_39, %c0_40] : memref<1x1x2xf32, #tpu.memory_space<vmem>>, vector<1x1x2xf32>
      %119 = vector.shape_cast %118 : vector<1x1x2xf32> to vector<1x2xf32>
      %c0_41 = arith.constant 0 : index
      %c0_42 = arith.constant 0 : index
      %120 = vector.load %arg6[%c0_41, %c0_42] : memref<2x8xf32, #tpu.memory_space<vmem>>, vector<2x8xf32>
      %cst_43 = arith.constant dense<0.000000e+00> : vector<1x8xf32>
      %121 = tpu.matmul %119, %120, %cst_43 {dimension_numbers = #tpu.dot_dimension_numbers<[1], [0], [0], [1], [0, 0, 1, 1], [], []>} : vector<1x2xf32>, vector<2x8xf32>, vector<1x8xf32> -> vector<1x8xf32>
      %c0_44 = arith.constant 0 : index
      %c0_45 = arith.constant 0 : index
      %122 = vector.load %arg10[%c0_44, %c0_45] : memref<1x8xf32, #tpu.memory_space<vmem>>, vector<1x8xf32>
      tpu.vector_store %arg10[%c0_44, %c0_45], %121 {strides = array<i32>} : memref<1x8xf32, #tpu.memory_space<vmem>>, vector<1x8xf32>,
      %cst_46 = arith.constant 0xFF800000 : f32
      %123 = vector.broadcast %cst_46 : f32 to vector<1x1xf32>
      %c0_47 = arith.constant 0 : index
      %c0_48 = arith.constant 0 : index
      %124 = vector.load %arg11[%c0_47, %c0_48] : memref<1x1xf32, #tpu.memory_space<vmem>>, vector<1x1xf32>
      tpu.vector_store %arg11[%c0_47, %c0_48], %123 {strides = array<i32>} : memref<1x1xf32, #tpu.memory_space<vmem>>, vector<1x1xf32>,
      %cst_49 = arith.constant 0.000000e+00 : f32
      %125 = vector.broadcast %cst_49 : f32 to vector<1x1xf32>
      %c0_50 = arith.constant 0 : index
      %c0_51 = arith.constant 0 : index
      %126 = vector.load %arg12[%c0_50, %c0_51] : memref<1x1xf32, #tpu.memory_space<vmem>>, vector<1x1xf32>
      tpu.vector_store %arg12[%c0_50, %c0_51], %125 {strides = array<i32>} : memref<1x1xf32, #tpu.memory_space<vmem>>, vector<1x1xf32>,
      %cst_52 = arith.constant 0.000000e+00 : f32
      %127 = vector.broadcast %cst_52 : f32 to vector<1x4xf32>
      %c0_53 = arith.constant 0 : index
      %c0_54 = arith.constant 0 : index
      %128 = vector.load %arg13[%c0_53, %c0_54] : memref<1x4xf32, #tpu.memory_space<vmem>>, vector<1x4xf32>
      tpu.vector_store %arg13[%c0_53, %c0_54], %127 {strides = array<i32>} : memref<1x4xf32, #tpu.memory_space<vmem>>, vector<1x4xf32>,
    } else {
    }
    %c0 = arith.constant 0 : index
    %c0_1 = arith.constant 0 : index
    %3 = vector.load %arg7[%c0, %c0_1] : memref<8x2xf32, #tpu.memory_space<vmem>>, vector<8x2xf32>
    %c0_2 = arith.constant 0 : index
    %c0_3 = arith.constant 0 : index
    %c0_4 = arith.constant 0 : index
    %4 = vector.load %arg4[%c0_2, %c0_3, %c0_4] : memref<1x2x10xf32, #tpu.memory_space<vmem>>, vector<1x2x10xf32>
    %5 = vector.shape_cast %4 : vector<1x2x10xf32> to vector<2x10xf32>
    %cst = arith.constant dense<0.000000e+00> : vector<8x10xf32>
    %6 = tpu.matmul %3, %5, %cst {dimension_numbers = #tpu.dot_dimension_numbers<[1], [0], [0], [1], [0, 0, 1, 1], [], []>} : vector<8x2xf32>, vector<2x10xf32>, vector<8x10xf32> -> vector<8x10xf32>
    %c0_5 = arith.constant 0 : index
    %c0_6 = arith.constant 0 : index
    %7 = vector.load %arg10[%c0_5, %c0_6] : memref<1x8xf32, #tpu.memory_space<vmem>>, vector<1x8xf32>
    %cst_7 = arith.constant 0.000000e+00 : f32
    %8 = vector.broadcast %cst_7 : f32 to vector<1x10xf32>
    %c0_8 = arith.constant 0 : index
    %c0_9 = arith.constant 0 : index
    %9 = memref.load %arg8[%c0_8, %c0_9] : memref<1x8xf32, #tpu.memory_space<smem>>
    %10 = vector.extract_strided_slice %7 {offsets = [0, 0], sizes = [1, 1], strides = [1, 1]} : vector<1x8xf32> to vector<1x1xf32>
    %11 = vector.extract_strided_slice %6 {offsets = [0, 0], sizes = [1, 10], strides = [1, 1]} : vector<8x10xf32> to vector<1x10xf32>
    %12 = vector.broadcast %10 : vector<1x1xf32> to vector<1x10xf32>
    %13 = arith.addf %12, %11 : vector<1x10xf32>
    %14 = math.tanh %13 : vector<1x10xf32>
    %15 = vector.broadcast %9 : f32 to vector<1x10xf32>
    %16 = arith.mulf %15, %14 : vector<1x10xf32>
    %17 = arith.addf %8, %16 : vector<1x10xf32>
    %c0_10 = arith.constant 0 : index
    %c1 = arith.constant 1 : index
    %18 = memref.load %arg8[%c0_10, %c1] : memref<1x8xf32, #tpu.memory_space<smem>>
    %19 = vector.extract_strided_slice %7 {offsets = [0, 1], sizes = [1, 1], strides = [1, 1]} : vector<1x8xf32> to vector<1x1xf32>
    %20 = vector.extract_strided_slice %6 {offsets = [1, 0], sizes = [1, 10], strides = [1, 1]} : vector<8x10xf32> to vector<1x10xf32>
    %21 = vector.broadcast %19 : vector<1x1xf32> to vector<1x10xf32>
    %22 = arith.addf %21, %20 : vector<1x10xf32>
    %23 = math.tanh %22 : vector<1x10xf32>
    %24 = vector.broadcast %18 : f32 to vector<1x10xf32>
    %25 = arith.mulf %24, %23 : vector<1x10xf32>
    %26 = arith.addf %17, %25 : vector<1x10xf32>
    %c0_11 = arith.constant 0 : index
    %c2 = arith.constant 2 : index
    %27 = memref.load %arg8[%c0_11, %c2] : memref<1x8xf32, #tpu.memory_space<smem>>
    %28 = vector.extract_strided_slice %7 {offsets = [0, 2], sizes = [1, 1], strides = [1, 1]} : vector<1x8xf32> to vector<1x1xf32>
    %29 = vector.extract_strided_slice %6 {offsets = [2, 0], sizes = [1, 10], strides = [1, 1]} : vector<8x10xf32> to vector<1x10xf32>
    %30 = vector.broadcast %28 : vector<1x1xf32> to vector<1x10xf32>
    %31 = arith.addf %30, %29 : vector<1x10xf32>
    %32 = math.tanh %31 : vector<1x10xf32>
    %33 = vector.broadcast %27 : f32 to vector<1x10xf32>
    %34 = arith.mulf %33, %32 : vector<1x10xf32>
    %35 = arith.addf %26, %34 : vector<1x10xf32>
    %c0_12 = arith.constant 0 : index
    %c3 = arith.constant 3 : index
    %36 = memref.load %arg8[%c0_12, %c3] : memref<1x8xf32, #tpu.memory_space<smem>>
    %37 = vector.extract_strided_slice %7 {offsets = [0, 3], sizes = [1, 1], strides = [1, 1]} : vector<1x8xf32> to vector<1x1xf32>
    %38 = vector.extract_strided_slice %6 {offsets = [3, 0], sizes = [1, 10], strides = [1, 1]} : vector<8x10xf32> to vector<1x10xf32>
    %39 = vector.broadcast %37 : vector<1x1xf32> to vector<1x10xf32>
    %40 = arith.addf %39, %38 : vector<1x10xf32>
    %41 = math.tanh %40 : vector<1x10xf32>
    %42 = vector.broadcast %36 : f32 to vector<1x10xf32>
    %43 = arith.mulf %42, %41 : vector<1x10xf32>
    %44 = arith.addf %35, %43 : vector<1x10xf32>
    %c0_13 = arith.constant 0 : index
    %c4 = arith.constant 4 : index
    %45 = memref.load %arg8[%c0_13, %c4] : memref<1x8xf32, #tpu.memory_space<smem>>
    %46 = vector.extract_strided_slice %7 {offsets = [0, 4], sizes = [1, 1], strides = [1, 1]} : vector<1x8xf32> to vector<1x1xf32>
    %47 = vector.extract_strided_slice %6 {offsets = [4, 0], sizes = [1, 10], strides = [1, 1]} : vector<8x10xf32> to vector<1x10xf32>
    %48 = vector.broadcast %46 : vector<1x1xf32> to vector<1x10xf32>
    %49 = arith.addf %48, %47 : vector<1x10xf32>
    %50 = math.tanh %49 : vector<1x10xf32>
    %51 = vector.broadcast %45 : f32 to vector<1x10xf32>
    %52 = arith.mulf %51, %50 : vector<1x10xf32>
    %53 = arith.addf %44, %52 : vector<1x10xf32>
    %c0_14 = arith.constant 0 : index
    %c5 = arith.constant 5 : index
    %54 = memref.load %arg8[%c0_14, %c5] : memref<1x8xf32, #tpu.memory_space<smem>>
    %55 = vector.extract_strided_slice %7 {offsets = [0, 5], sizes = [1, 1], strides = [1, 1]} : vector<1x8xf32> to vector<1x1xf32>
    %56 = vector.extract_strided_slice %6 {offsets = [5, 0], sizes = [1, 10], strides = [1, 1]} : vector<8x10xf32> to vector<1x10xf32>
    %57 = vector.broadcast %55 : vector<1x1xf32> to vector<1x10xf32>
    %58 = arith.addf %57, %56 : vector<1x10xf32>
    %59 = math.tanh %58 : vector<1x10xf32>
    %60 = vector.broadcast %54 : f32 to vector<1x10xf32>
    %61 = arith.mulf %60, %59 : vector<1x10xf32>
    %62 = arith.addf %53, %61 : vector<1x10xf32>
    %c0_15 = arith.constant 0 : index
    %c6 = arith.constant 6 : index
    %63 = memref.load %arg8[%c0_15, %c6] : memref<1x8xf32, #tpu.memory_space<smem>>
    %64 = vector.extract_strided_slice %7 {offsets = [0, 6], sizes = [1, 1], strides = [1, 1]} : vector<1x8xf32> to vector<1x1xf32>
    %65 = vector.extract_strided_slice %6 {offsets = [6, 0], sizes = [1, 10], strides = [1, 1]} : vector<8x10xf32> to vector<1x10xf32>
    %66 = vector.broadcast %64 : vector<1x1xf32> to vector<1x10xf32>
    %67 = arith.addf %66, %65 : vector<1x10xf32>
    %68 = math.tanh %67 : vector<1x10xf32>
    %69 = vector.broadcast %63 : f32 to vector<1x10xf32>
    %70 = arith.mulf %69, %68 : vector<1x10xf32>
    %71 = arith.addf %62, %70 : vector<1x10xf32>
    %c0_16 = arith.constant 0 : index
    %c7 = arith.constant 7 : index
    %72 = memref.load %arg8[%c0_16, %c7] : memref<1x8xf32, #tpu.memory_space<smem>>
    %73 = vector.extract_strided_slice %7 {offsets = [0, 7], sizes = [1, 1], strides = [1, 1]} : vector<1x8xf32> to vector<1x1xf32>
    %74 = vector.extract_strided_slice %6 {offsets = [7, 0], sizes = [1, 10], strides = [1, 1]} : vector<8x10xf32> to vector<1x10xf32>
    %75 = vector.broadcast %73 : vector<1x1xf32> to vector<1x10xf32>
    %76 = arith.addf %75, %74 : vector<1x10xf32>
    %77 = math.tanh %76 : vector<1x10xf32>
    %78 = vector.broadcast %72 : f32 to vector<1x10xf32>
    %79 = arith.mulf %78, %77 : vector<1x10xf32>
    %80 = arith.addf %71, %79 : vector<1x10xf32>
    %81 = arith.index_cast %arg0 : i32 to index
    %82 = memref.load %arg2[%81] : memref<2xi32, #tpu.memory_space<smem>>
    %c10_i32 = arith.constant 10 : i32
    %83 = arith.muli %arg1, %c10_i32 : i32
    %84 = tpu.iota {dimensions = array<i32: 1>} : vector<1x10xi32>
    %85 = vector.broadcast %83 : i32 to vector<1x10xi32>
    %86 = arith.addi %85, %84 : vector<1x10xi32>
    %87 = vector.broadcast %82 : i32 to vector<1x10xi32>
    %88 = arith.cmpi slt, %86, %87 : vector<1x10xi32>
    %cst_17 = arith.constant -1.000000e+06 : f32
    %89 = vector.broadcast %cst_17 : f32 to vector<1x10xf32>
    %90 = arith.select %88, %80, %89 : vector<1x10xi1>, vector<1x10xf32>
    %c0_18 = arith.constant 0 : index
    %c0_19 = arith.constant 0 : index
    %91 = vector.load %arg11[%c0_18, %c0_19] : memref<1x1xf32, #tpu.memory_space<vmem>>, vector<1x1xf32>
    %cst_20 = arith.constant dense<0xFF800000> : vector<1xf32>
    %92 = vector.multi_reduction <maximumf>, %90, %cst_20 [1] : vector<1x10xf32> to vector<1xf32>
    %93 = vector.shape_cast %92 : vector<1xf32> to vector<1x1xf32>
    %94 = arith.maximumf %91, %93 : vector<1x1xf32>
    %95 = arith.subf %91, %94 : vector<1x1xf32>
    %96 = math.exp %95 : vector<1x1xf32>
    %97 = vector.broadcast %94 : vector<1x1xf32> to vector<1x10xf32>
    %98 = arith.subf %90, %97 : vector<1x10xf32>
    %99 = math.exp %98 : vector<1x10xf32>
    %c0_21 = arith.constant 0 : index
    %c0_22 = arith.constant 0 : index
    %c0_23 = arith.constant 0 : index
    %100 = vector.load %arg5[%c0_21, %c0_22, %c0_23] : memref<1x10x4xf32, #tpu.memory_space<vmem>>, vector<1x10x4xf32>
    %101 = vector.shape_cast %100 : vector<1x10x4xf32> to vector<10x4xf32>
    %c0_24 = arith.constant 0 : index
    %c0_25 = arith.constant 0 : index
    %102 = vector.load %arg12[%c0_24, %c0_25] : memref<1x1xf32, #tpu.memory_space<vmem>>, vector<1x1xf32>
    %103 = arith.mulf %96, %102 : vector<1x1xf32>
    %cst_26 = arith.constant dense<0.000000e+00> : vector<1xf32>
    %104 = vector.multi_reduction <add>, %99, %cst_26 [1] : vector<1x10xf32> to vector<1xf32>
    %105 = vector.shape_cast %104 : vector<1xf32> to vector<1x1xf32>
    %106 = arith.addf %103, %105 : vector<1x1xf32>
    %c0_27 = arith.constant 0 : index
    %c0_28 = arith.constant 0 : index
    %107 = vector.load %arg12[%c0_27, %c0_28] : memref<1x1xf32, #tpu.memory_space<vmem>>, vector<1x1xf32>
    tpu.vector_store %arg12[%c0_27, %c0_28], %106 {strides = array<i32>} : memref<1x1xf32, #tpu.memory_space<vmem>>, vector<1x1xf32>,
    %c0_29 = arith.constant 0 : index
    %c0_30 = arith.constant 0 : index
    %108 = vector.load %arg13[%c0_29, %c0_30] : memref<1x4xf32, #tpu.memory_space<vmem>>, vector<1x4xf32>
    %109 = vector.broadcast %96 : vector<1x1xf32> to vector<1x4xf32>
    %110 = arith.mulf %109, %108 : vector<1x4xf32>
    %cst_31 = arith.constant dense<0.000000e+00> : vector<1x4xf32>
    %111 = tpu.matmul %99, %101, %cst_31 {dimension_numbers = #tpu.dot_dimension_numbers<[1], [0], [0], [1], [0, 0, 1, 1], [], []>} : vector<1x10xf32>, vector<10x4xf32>, vector<1x4xf32> -> vector<1x4xf32>
    %112 = arith.addf %110, %111 : vector<1x4xf32>
    %c0_32 = arith.constant 0 : index
    %c0_33 = arith.constant 0 : index
    %113 = vector.load %arg13[%c0_32, %c0_33] : memref<1x4xf32, #tpu.memory_space<vmem>>, vector<1x4xf32>
    tpu.vector_store %arg13[%c0_32, %c0_33], %112 {strides = array<i32>} : memref<1x4xf32, #tpu.memory_space<vmem>>, vector<1x4xf32>,
    %c0_34 = arith.constant 0 : index
    %c0_35 = arith.constant 0 : index
    %114 = vector.load %arg11[%c0_34, %c0_35] : memref<1x1xf32, #tpu.memory_space<vmem>>, vector<1x1xf32>
    tpu.vector_store %arg11[%c0_34, %c0_35], %94 {strides = array<i32>} : memref<1x1xf32, #tpu.memory_space<vmem>>, vector<1x1xf32>,
    %c0_i32_36 = arith.constant 0 : i32
    %115 = arith.cmpi eq, %arg1, %c0_i32_36 : i32
    %116 = arith.extui %115 : i1 to i32
    %c0_i32_37 = arith.constant 0 : i32
    %117 = arith.cmpi ne, %116, %c0_i32_37 : i32
    scf.if %117 {
      %c0_38 = arith.constant 0 : index
      %c0_39 = arith.constant 0 : index
      %118 = vector.load %arg12[%c0_38, %c0_39] : memref<1x1xf32, #tpu.memory_space<vmem>>, vector<1x1xf32>
      %119 = tpu.reciprocal %118 {approx = true} : vector<1x1xf32> -> vector<1x1xf32>
      %c0_40 = arith.constant 0 : index
      %c0_41 = arith.constant 0 : index
      %120 = vector.load %arg13[%c0_40, %c0_41] : memref<1x4xf32, #tpu.memory_space<vmem>>, vector<1x4xf32>
      %121 = vector.broadcast %119 : vector<1x1xf32> to vector<1x4xf32>
      %122 = arith.mulf %120, %121 : vector<1x4xf32>
      %c0_42 = arith.constant 0 : index
      %c0_43 = arith.constant 0 : index
      %c0_44 = arith.constant 0 : index
      %123 = vector.load %arg9[%c0_42, %c0_43, %c0_44] : memref<1x1x4xf32, #tpu.memory_space<vmem>>, vector<1x1x4xf32>
      %124 = vector.shape_cast %123 : vector<1x1x4xf32> to vector<1x4xf32>
      %125 = vector.shape_cast %122 : vector<1x4xf32> to vector<1x1x4xf32>
      tpu.vector_store %arg9[%c0_42, %c0_43, %c0_44], %125 {strides = array<i32>} : memref<1x1x4xf32, #tpu.memory_space<vmem>>, vector<1x1x4xf32>,
    } else {
    }
    return
  }
  func.func @transform_0(%arg0: i32, %arg1: i32, %arg2: memref<2xi32, #tpu.memory_space<smem>>) -> (i32, i32, i32) {
    %c0_i32 = arith.constant 0 : i32
    %c0_i32_0 = arith.constant 0 : i32
    %c0_i32_1 = arith.constant 0 : i32
    return %arg0, %c0_i32, %c0_i32_0 : i32, i32, i32
  }
  func.func @transform_1(%arg0: i32, %arg1: i32, %arg2: memref<2xi32, #tpu.memory_space<smem>>) -> (i32, i32, i32) {
    %c0_i32 = arith.constant 0 : i32
    %c0_i32_0 = arith.constant 0 : i32
    return %arg0, %c0_i32, %arg1 : i32, i32, i32
  }
  func.func @transform_2(%arg0: i32, %arg1: i32, %arg2: memref<2xi32, #tpu.memory_space<smem>>) -> (i32, i32, i32) {
    %c0_i32 = arith.constant 0 : i32
    %c0_i32_0 = arith.constant 0 : i32
    return %arg0, %arg1, %c0_i32 : i32, i32, i32
  }
  func.func @transform_3(%arg0: i32, %arg1: i32, %arg2: memref<2xi32, #tpu.memory_space<smem>>) -> (i32, i32) {
    %c0_i32 = arith.constant 0 : i32
    %c0_i32_0 = arith.constant 0 : i32
    %c0_i32_1 = arith.constant 0 : i32
    return %c0_i32, %c0_i32_0 : i32, i32
  }
  func.func @transform_4(%arg0: i32, %arg1: i32, %arg2: memref<2xi32, #tpu.memory_space<smem>>) -> (i32, i32) {
    %c0_i32 = arith.constant 0 : i32
    %c0_i32_0 = arith.constant 0 : i32
    %c0_i32_1 = arith.constant 0 : i32
    return %c0_i32, %c0_i32_0 : i32, i32
  }
  func.func @transform_5(%arg0: i32, %arg1: i32, %arg2: memref<2xi32, #tpu.memory_space<smem>>) -> (i32, i32) {
    %c0_i32 = arith.constant 0 : i32
    %c0_i32_0 = arith.constant 0 : i32
    %c0_i32_1 = arith.constant 0 : i32
    return %c0_i32, %c0_i32_0 : i32, i32
  }
  func.func @transform_6(%arg0: i32, %arg1: i32, %arg2: memref<2xi32, #tpu.memory_space<smem>>) -> (i32, i32, i32) {
    %c0_i32 = arith.constant 0 : i32
    %c0_i32_0 = arith.constant 0 : i32
    %c0_i32_1 = arith.constant 0 : i32
    return %arg0, %c0_i32, %c0_i32_0 : i32, i32, i32
  }
}

</mosaic_0001>

<llo_original>
// kernel: tpu_custom_call.1
$region0: #{tpu_custom_call.1}
  #allocation0 [shape = 'u32[]', space=smem, size = 0x4, offset = 0x4, fixed_abs, tag = 'smem constant byte address 0x4 - core index']
  #allocation1 [shape = 'u32[144,128]{1,0:T(1,128)}', space=vmem, size = 0x12000, scoped, tag = 'internal scratch']
  #allocation2 [shape = 'f32[1,8]{1,0:T(1,128)}', space=vmem, size = 0x200, scoped, tag = 'scratch operand']
  #allocation3 [shape = 'f32[1,1]{1,0:T(1,128)}', space=vmem, size = 0x200, scoped, tag = 'scratch operand']
  #allocation4 [shape = 'f32[1,1]{1,0:T(1,128)}', space=vmem, size = 0x200, scoped, tag = 'scratch operand']
  #allocation5 [shape = 'f32[1,4]{1,0:T(1,128)}', space=vmem, size = 0x200, scoped, tag = 'scratch operand']
  #allocation6 [shape = 's32[1]{0}', space=sflag, size = 0x4, scoped, tag = 'scoped memory for tpu_custom_call.1']
  #allocation7 [shape = 'u8[512]{0}', space=smem, size = 0x200, scoped, tag = 'prefetched SMEM operand 0']
  %s0 = inlined_call_operand.vmem [shape: s32[2], index: 0, kind: input, shape index: {}]
  %s1 = inlined_call_operand.vmem [shape: f32[2,1,2], index: 1, kind: input, shape index: {}]
  %s2 = inlined_call_operand.vmem [shape: f32[2,2,10], index: 2, kind: input, shape index: {}]
  %s3 = inlined_call_operand.vmem [shape: f32[2,10,4], index: 3, kind: input, shape index: {}]
  %s4 = inlined_call_operand.vmem [shape: f32[2,8], index: 4, kind: input, shape index: {}]
  %s5 = inlined_call_operand.vmem [shape: f32[8,2], index: 5, kind: input, shape index: {}]
  %s6 = inlined_call_operand.vmem [shape: f32[1,8], index: 6, kind: input, shape index: {}]
  %s7 = inlined_call_operand.hbm [shape: f32[2,1,4], index: 7, kind: output, shape index: {}]
  %s8 = sld [smem:[#allocation0]]
  $region69: #{tpu_custom_call.1} parent=0
    _
  %s10 = ssub.s32 1, %s8
  %s11 = scalar_select 0, %s10, %s8
  %s12 = sshll.u32 %s0, 4
  %s13 = int_to_ptr.vmem [resolvable:$true] %s12
  %15 = dma.vmem_to_smem %s13, 16, [#allocation7], [#allocation6]
  %16 = dma.done [#allocation6], 16
  %17 = sfence
  $region1: #{tpu_custom_call.1} parent=0
    #allocation8 [shape = 'u8[512]{0}', space=smem, size = 0x200, scoped, tag = 'input window, operand 6, single buffered']
    #allocation9 [shape = 's32[2]{0}', space=sflag, size = 0x8, scoped, tag = 'scoped memory for tpu_custom_call.1']
    #allocation10 [shape = 's32[2]{0}', space=sflag, size = 0x8, scoped, tag = 'scoped memory for tpu_custom_call.1']
    #allocation11 [shape = 'u8[1024]{0}', space=vmem, size = 0x400, scoped, tag = 'output window, operand 0']
    %18 = vsyncpa [#allocation10], 0
    %19 = vsyncpa [#allocation9], 0
    %s20 = scalar_lea.sflag [#allocation9], 1
    %21 = vsyncpa %s20, 0
    loop: start=0, step=1, limit=4
    $region2: #{tpu_custom_call.1} parent=1 // loop_pre_header
      _
    $region3: #{tpu_custom_call.1} parent=1 // loop_header
      %s23 = sphi 0, %s27
      %p24 = scmp.ge.s32.totalorder %s23, 4
      %s30 = sphi 0, %s42
      %s31 = sphi 0, %s38
      %s32 = sphi 0, %s30
      %s33 = sphi 0, %s31
      %s34 = sphi 0, %s32
      %s35 = sphi 0, %s33
      %s45 = sphi 0, %s47
      %s48 = sphi 0, %s45
      %s49 = sphi 0, %s48
      %s65 = sphi 0, %s49
      %s73 = sphi 0, %s75
      %s76 = sphi 0, %s73
      %s77 = sphi 0, %s76
      %s93 = sphi 0, %s77
      %s101 = sphi 0, %s103
      %s104 = sphi 0, %s101
      %s105 = sphi 0, %s104
      %s121 = sphi 0, %s105
      %s125 = sphi 0, %s125
      %s127 = sphi 0, %s125
      %s128 = sphi 0, %s127
      %s142 = sphi 0, %s128
      %s146 = sphi 0, %s146
      %s148 = sphi 0, %s146
      %s149 = sphi 0, %s148
      %s163 = sphi 0, %s149
      %s167 = sphi 0, %s167
      %s169 = sphi 0, %s167
      %s170 = sphi 0, %s169
      %s184 = sphi 0, %s170
      %s190 = sphi 0, %s192
      %s193 = sphi 0, %s190
      %s194 = sphi 0, %s193
      %s210 = sphi 0, %s194
    $region4: #{tpu_custom_call.1} parent=1 // loop_header_branch
      %26 = sbr.rel (%p24) target = $region8
    $region5: #{tpu_custom_call.1} parent=1 // loop_body
      %s28 = ssub.s32 %s23, 1
      %s29 = ssub.s32 %s23, 2
      %s36 = sadd.s32 1, %s31
      %p37 = scmp.ge.s32.totalorder %s36, 1
      %s38 = scalar_select %p37, 0, %s36
      %s39 = sadd.s32 1, %s30
      %s40 = scalar_select %p37, %s39, %s30
      %p41 = scmp.ge.s32.totalorder %s40, 2
      %s42 = scalar_select %p41, 0, %s40
      %s43 = ssub.s32 %s30, %s42
      %p44 = scmp.eq.s32.totalorder %s43, 0
      %s46 = sadd.s32 %s45, 1
      %s47 = scalar_select %p44, %s45, %s46
      %p50 = pneg %p44
      %p51 = scmp.eq.s32.totalorder %s23, 1
      %p52 = por %p50, %p51
      %p53 = scmp.ne.s32.totalorder %s45, %s48
      %p54 = scmp.eq.s32.totalorder %s23, 0
      %p55 = por %p53, %p54
      %p56 = scmp.ne.s32.totalorder %s45, %s48
      %p57 = scmp.eq.s32.totalorder %s28, 1
      %p58 = por %p56, %p57
      %p59 = scmp.ne.s32.totalorder %s48, %s49
      %p60 = scmp.eq.s32.totalorder %s28, 0
      %p61 = por %p59, %p60
      %p62 = scmp.ne.s32.totalorder %s48, %s49
      %p63 = scmp.eq.s32.totalorder %s29, 1
      %p64 = por %p62, %p63
      %p66 = scmp.ne.s32.totalorder %s49, %s65
      %p67 = scmp.eq.s32.totalorder %s29, 0
      %p68 = por %p66, %p67
      %s69 = ssub.s32 %s30, %s42
      %s70 = ssub.s32 %s31, %s38
      %s71 = sor.u32 %s69, %s70
      %p72 = scmp.eq.s32.totalorder %s71, 0
      %s74 = sadd.s32 %s73, 1
      %s75 = scalar_select %p72, %s73, %s74
      %p78 = pneg %p72
      %p79 = scmp.eq.s32.totalorder %s23, 1
      %p80 = por %p78, %p79
      %p81 = scmp.ne.s32.totalorder %s73, %s76
      %p82 = scmp.eq.s32.totalorder %s23, 0
      %p83 = por %p81, %p82
      %p84 = scmp.ne.s32.totalorder %s73, %s76
      %p85 = scmp.eq.s32.totalorder %s28, 1
      %p86 = por %p84, %p85
      %p87 = scmp.ne.s32.totalorder %s76, %s77
      %p88 = scmp.eq.s32.totalorder %s28, 0
      %p89 = por %p87, %p88
      %p90 = scmp.ne.s32.totalorder %s76, %s77
      %p91 = scmp.eq.s32.totalorder %s29, 1
      %p92 = por %p90, %p91
      %p94 = scmp.ne.s32.totalorder %s77, %s93
      %p95 = scmp.eq.s32.totalorder %s29, 0
      %p96 = por %p94, %p95
      %s97 = ssub.s32 %s30, %s42
      %s98 = ssub.s32 %s31, %s38
      %s99 = sor.u32 %s97, %s98
      %p100 = scmp.eq.s32.totalorder %s99, 0
      %s102 = sadd.s32 %s101, 1
      %s103 = scalar_select %p100, %s101, %s102
      %p106 = pneg %p100
      %p107 = scmp.eq.s32.totalorder %s23, 1
      %p108 = por %p106, %p107
      %p109 = scmp.ne.s32.totalorder %s101, %s104
      %p110 = scmp.eq.s32.totalorder %s23, 0
      %p111 = por %p109, %p110
      %p112 = scmp.ne.s32.totalorder %s101, %s104
      %p113 = scmp.eq.s32.totalorder %s28, 1
      %p114 = por %p112, %p113
      %p115 = scmp.ne.s32.totalorder %s104, %s105
      %p116 = scmp.eq.s32.totalorder %s28, 0
      %p117 = por %p115, %p116
      %p118 = scmp.ne.s32.totalorder %s104, %s105
      %p119 = scmp.eq.s32.totalorder %s29, 1
      %p120 = por %p118, %p119
      %p122 = scmp.ne.s32.totalorder %s105, %s121
      %p123 = scmp.eq.s32.totalorder %s29, 0
      %p124 = por %p122, %p123
      %s126 = sadd.s32 %s125, 1
      %p129 = scmp.eq.s32.totalorder %s23, 1
      %p130 = scmp.ne.s32.totalorder %s125, %s127
      %p131 = scmp.eq.s32.totalorder %s23, 0
      %p132 = por %p130, %p131
      %p133 = scmp.ne.s32.totalorder %s125, %s127
      %p134 = scmp.eq.s32.totalorder %s28, 1
      %p135 = por %p133, %p134
      %p136 = scmp.ne.s32.totalorder %s127, %s128
      %p137 = scmp.eq.s32.totalorder %s28, 0
      %p138 = por %p136, %p137
      %p139 = scmp.ne.s32.totalorder %s127, %s128
      %p140 = scmp.eq.s32.totalorder %s29, 1
      %p141 = por %p139, %p140
      %p143 = scmp.ne.s32.totalorder %s128, %s142
      %p144 = scmp.eq.s32.totalorder %s29, 0
      %p145 = por %p143, %p144
      %s147 = sadd.s32 %s146, 1
      %p150 = scmp.eq.s32.totalorder %s23, 1
      %p151 = scmp.ne.s32.totalorder %s146, %s148
      %p152 = scmp.eq.s32.totalorder %s23, 0
      %p153 = por %p151, %p152
      %p154 = scmp.ne.s32.totalorder %s146, %s148
      %p155 = scmp.eq.s32.totalorder %s28, 1
      %p156 = por %p154, %p155
      %p157 = scmp.ne.s32.totalorder %s148, %s149
      %p158 = scmp.eq.s32.totalorder %s28, 0
      %p159 = por %p157, %p158
      %p160 = scmp.ne.s32.totalorder %s148, %s149
      %p161 = scmp.eq.s32.totalorder %s29, 1
      %p162 = por %p160, %p161
      %p164 = scmp.ne.s32.totalorder %s149, %s163
      %p165 = scmp.eq.s32.totalorder %s29, 0
      %p166 = por %p164, %p165
      %s168 = sadd.s32 %s167, 1
      %p171 = scmp.eq.s32.totalorder %s23, 1
      %p172 = scmp.ne.s32.totalorder %s167, %s169
      %p173 = scmp.eq.s32.totalorder %s23, 0
      %p174 = por %p172, %p173
      %p175 = scmp.ne.s32.totalorder %s167, %s169
      %p176 = scmp.eq.s32.totalorder %s28, 1
      %p177 = por %p175, %p176
      %p178 = scmp.ne.s32.totalorder %s169, %s170
      %p179 = scmp.eq.s32.totalorder %s28, 0
      %p180 = por %p178, %p179
      %p181 = scmp.ne.s32.totalorder %s169, %s170
      %p182 = scmp.eq.s32.totalorder %s29, 1
      %p183 = por %p181, %p182
      %p185 = scmp.ne.s32.totalorder %s170, %s184
      %p186 = scmp.eq.s32.totalorder %s29, 0
      %p187 = por %p185, %p186
      %s188 = ssub.s32 %s30, %s42
      %p189 = scmp.eq.s32.totalorder %s188, 0
      %s191 = sadd.s32 %s190, 1
      %s192 = scalar_select %p189, %s190, %s191
      %p195 = pneg %p189
      %p196 = scmp.eq.s32.totalorder %s23, 1
      %p197 = por %p195, %p196
      %p198 = scmp.ne.s32.totalorder %s190, %s193
      %p199 = scmp.eq.s32.totalorder %s23, 0
      %p200 = por %p198, %p199
      %p201 = scmp.ne.s32.totalorder %s190, %s193
      %p202 = scmp.eq.s32.totalorder %s28, 1
      %p203 = por %p201, %p202
      %p204 = scmp.ne.s32.totalorder %s193, %s194
      %p205 = scmp.eq.s32.totalorder %s28, 0
      %p206 = por %p204, %p205
      %p207 = scmp.ne.s32.totalorder %s193, %s194
      %p208 = scmp.eq.s32.totalorder %s29, 1
      %p209 = por %p207, %p208
      %p211 = scmp.ne.s32.totalorder %s194, %s210
      %p212 = scmp.eq.s32.totalorder %s29, 0
      %p213 = por %p211, %p212
      %p214 = scmp.le.s32.totalorder 1, %s23
      %p215 = scmp.lt.s32.totalorder %s23, 3
      %p216 = pnand %p214, %p215
      %p217 = pneg %p216
      // Predicated region
      $region9: #{tpu_custom_call.1} parent=5 // pred_check
        _
      $region10: #{tpu_custom_call.1} parent=5 // pred_check_branch
        %219 = sbr.rel (%p216) target = $region12
      $region11: #{tpu_custom_call.1} parent=5 // pred_region
        %s220 = ssub.s32 %s23, 1
        // Predicated region
        $region13: #{tpu_custom_call.1} parent=11 // pred_check
          %p221 = pneg %p138
        $region14: #{tpu_custom_call.1} parent=11 // pred_check_branch
          %223 = sbr.rel (%p221) target = $region16
        $region15: #{tpu_custom_call.1} parent=11 // pred_region
          _
        $region16: #{tpu_custom_call.1} parent=11 // pred_fallthru
          _
        // Predicated region
        $region17: #{tpu_custom_call.1} parent=11 // pred_check
          %p224 = pneg %p159
        $region18: #{tpu_custom_call.1} parent=11 // pred_check_branch
          %226 = sbr.rel (%p224) target = $region20
        $region19: #{tpu_custom_call.1} parent=11 // pred_region
          _
        $region20: #{tpu_custom_call.1} parent=11 // pred_fallthru
          _
        // Predicated region
        $region21: #{tpu_custom_call.1} parent=11 // pred_check
          %p227 = pneg %p180
        $region22: #{tpu_custom_call.1} parent=11 // pred_check_branch
          %229 = sbr.rel (%p227) target = $region24
        $region23: #{tpu_custom_call.1} parent=11 // pred_region
          %s231 = ssub.s32 16, 16
          %232 = vsyncadd [#allocation10], %s231
          %s234 = sshll.u32 %s6, 4
          %s235 = int_to_ptr.vmem [resolvable:$true] %s234
          %237 = dma.vmem_to_smem %s235, 16, [#allocation8], [#allocation10]
        $region24: #{tpu_custom_call.1} parent=11 // pred_fallthru
          _
      $region12: #{tpu_custom_call.1} parent=5 // pred_fallthru
        _
      %p238 = scmp.lt.s32.totalorder %s23, 2
      // Predicated region
      $region25: #{tpu_custom_call.1} parent=5 // pred_check
        %p239 = pneg %p238
      $region26: #{tpu_custom_call.1} parent=5 // pred_check_branch
        %241 = sbr.rel (%p239) target = $region28
      $region27: #{tpu_custom_call.1} parent=5 // pred_region
        // Predicated region
        $region29: #{tpu_custom_call.1} parent=27 // pred_check
          %p242 = pneg %p55
        $region30: #{tpu_custom_call.1} parent=27 // pred_check_branch
          %244 = sbr.rel (%p242) target = $region32
        $region31: #{tpu_custom_call.1} parent=27 // pred_region
          %p245 = scmp.lt.s32.totalorder %s30, 1
          %s246 = scalar_select %p245, %s30, 1
          %s247 = scalar_lea.vmem %s1, %s246
        $region32: #{tpu_custom_call.1} parent=27 // pred_fallthru
          _
        // Predicated region
        $region33: #{tpu_custom_call.1} parent=27 // pred_check
          %p248 = pneg %p83
        $region34: #{tpu_custom_call.1} parent=27 // pred_check_branch
          %250 = sbr.rel (%p248) target = $region36
        $region35: #{tpu_custom_call.1} parent=27 // pred_region
          %p251 = scmp.lt.s32.totalorder %s30, 1
          %s252 = scalar_select %p251, %s30, 1
          %p253 = scmp.lt.s32.totalorder %s31, 0
          %s254 = scalar_select %p253, %s31, 0
          %s255 = sadd.s32 %s254, %s252
          %s256 = smul.addr %s255, 2
          %s257 = scalar_lea.vmem %s2, %s256
        $region36: #{tpu_custom_call.1} parent=27 // pred_fallthru
          _
        // Predicated region
        $region37: #{tpu_custom_call.1} parent=27 // pred_check
          %p258 = pneg %p111
        $region38: #{tpu_custom_call.1} parent=27 // pred_check_branch
          %260 = sbr.rel (%p258) target = $region40
        $region39: #{tpu_custom_call.1} parent=27 // pred_region
          %s261 = smul.u32 2, %s31
          %p262 = scmp.lt.s32.totalorder %s30, 1
          %s263 = scalar_select %p262, %s30, 1
          %p264 = scmp.lt.s32.totalorder %s261, 1
          %s265 = scalar_select %p264, %s261, 1
          %s266 = smul.addr %s263, 2
          %s267 = sadd.s32 %s265, %s266
          %s268 = smul.addr %s267, 8
          %s269 = scalar_lea.vmem %s3, %s268
          %s270 = smul.u32 2, %s31
        $region40: #{tpu_custom_call.1} parent=27 // pred_fallthru
          _
      $region28: #{tpu_custom_call.1} parent=5 // pred_fallthru
        _
      %p271 = scmp.le.s32.totalorder 1, %s23
      %p272 = scmp.lt.s32.totalorder %s23, 3
      %p273 = pnand %p271, %p272
      %p274 = pneg %p273
      // Predicated region
      $region41: #{tpu_custom_call.1} parent=5 // pred_check
        _
      $region42: #{tpu_custom_call.1} parent=5 // pred_check_branch
        %276 = sbr.rel (%p273) target = $region44
      $region43: #{tpu_custom_call.1} parent=5 // pred_region
        %s277 = ssub.s32 %s23, 1
        // Predicated region
        $region45: #{tpu_custom_call.1} parent=43 // pred_check
          %p278 = pneg %p180
        $region46: #{tpu_custom_call.1} parent=43 // pred_check_branch
          %280 = sbr.rel (%p278) target = $region48
        $region47: #{tpu_custom_call.1} parent=43 // pred_region
          %281 = dma.done [#allocation10], 16
        $region48: #{tpu_custom_call.1} parent=43 // pred_fallthru
          _
        %282 = sfence
        %p283 = scmp.lt.s32.totalorder %s32, 1
        %s284 = scalar_select %p283, %s32, 1
        %s285 = scalar_lea.vmem %s1, %s284
        %p286 = pneg %p61
        %p287 = pneg %p58
        %p288 = scmp.lt.s32.totalorder %s32, 1
        %s289 = scalar_select %p288, %s32, 1
        %p290 = scmp.lt.s32.totalorder %s33, 0
        %s291 = scalar_select %p290, %s33, 0
        %s292 = sadd.s32 %s291, %s289
        %s293 = smul.addr %s292, 2
        %s294 = scalar_lea.vmem %s2, %s293
        %p295 = pneg %p89
        %p296 = pneg %p86
        %s297 = smul.u32 2, %s33
        %p298 = scmp.lt.s32.totalorder %s32, 1
        %s299 = scalar_select %p298, %s32, 1
        %p300 = scmp.lt.s32.totalorder %s297, 1
        %s301 = scalar_select %p300, %s297, 1
        %s302 = smul.addr %s299, 2
        %s303 = sadd.s32 %s301, %s302
        %s304 = smul.addr %s303, 8
        %s305 = scalar_lea.vmem %s3, %s304
        %p306 = pneg %p117
        %p307 = pneg %p114
        %p308 = pneg %p138
        %p309 = pneg %p135
        %p310 = pneg %p159
        %p311 = pneg %p156
        %p312 = pneg %p180
        %p313 = pneg %p177
        %p314 = pneg %p206
        %p315 = pneg %p203
        %s316 = sand.u32 %s193, 1
        %s317 = scalar_lea.sflag [#allocation9], %s316
        %s318 = sand.u32 %s193, 1
        %s319 = scalar_lea.vmem [#allocation11], %s318
        %p320 = scmp.lt.s32.totalorder %s32, 1
        %s321 = scalar_select %p320, %s32, 1
        %s322 = scalar_lea.vmem %s1, %s321
        %p323 = scmp.lt.s32.totalorder %s32, 1
        %s324 = scalar_select %p323, %s32, 1
        %p325 = scmp.lt.s32.totalorder %s33, 0
        %s326 = scalar_select %p325, %s33, 0
        %s327 = sadd.s32 %s326, %s324
        %s328 = smul.addr %s327, 2
        %s329 = scalar_lea.vmem %s2, %s328
        %s330 = smul.u32 2, %s33
        %p331 = scmp.lt.s32.totalorder %s32, 1
        %s332 = scalar_select %p331, %s32, 1
        %p333 = scmp.lt.s32.totalorder %s330, 1
        %s334 = scalar_select %p333, %s330, 1
        %s335 = smul.addr %s332, 2
        %s336 = sadd.s32 %s334, %s335
        %s337 = smul.addr %s336, 8
        %s338 = scalar_lea.vmem %s3, %s337
        %s339 = smul.u32 2, %s33
        %p340 = scmp.eq.s32.totalorder %s33, 0
        // Predicated region
        $region49: #{tpu_custom_call.1} parent=43 // pred_check
          %p341 = pneg %p340
        $region50: #{tpu_custom_call.1} parent=43 // pred_check_branch
          %343 = sbr.rel (%p341) target = $region52
        $region51: #{tpu_custom_call.1} parent=43 // pred_region
          %v344 = vld [vmem:[%s322] sm:$0x1]
          %v345 = vld [vmem:[%s4] sm:$0x3]
          %vm346 = vcmask 15360
          %v348 = vsel %vm346, %v344, 0
          %vm350 = vcmask 1041408
          %v352 = vsel %vm350, %v345, 0
          %354 = vmatprep.subr.mxu0 0.0
          %355 = vmatpush1.msra.mxu0 %v352
          %356 = vmatprep.subr.mxu0 0.0
          %357 = vmatpush1.msra.mxu0 0.0
          %358 = vmatprep.subr.mxu0 0.0
          %359 = vmatpush1.msra.mxu0 0.0
          %360 = vmatprep.subr.mxu0 0.0
          %361 = vmatpush1.msra.mxu0 0.0
          %362 = vmatprep.subr.mxu0 0.0
          %363 = vmatpush1.msra.mxu0 0.0
          %364 = vmatprep.subr.mxu0 0.0
          %365 = vmatpush1.msra.mxu0 0.0
          %366 = vmatprep.subr.mxu0 0.0
          %367 = vmatpush1.msra.mxu0 0.0
          %368 = vmatprep.subr.mxu0 0.0
          %369 = vmatpush1.msra.mxu0 0.0
          %370 = vmatprep.subr.mxu0 0.0
          %371 = vmatpush1.msra.mxu0 0.0
          %372 = vmatprep.subr.mxu0 0.0
          %373 = vmatpush1.msra.mxu0 0.0
          %374 = vmatprep.subr.mxu0 0.0
          %375 = vmatpush1.msra.mxu0 0.0
          %376 = vmatprep.subr.mxu0 0.0
          %377 = vmatpush1.msra.mxu0 0.0
          %378 = vmatprep.subr.mxu0 0.0
          %379 = vmatpush1.msra.mxu0 0.0
          %380 = vmatprep.subr.mxu0 0.0
          %381 = vmatpush1.msra.mxu0 0.0
          %382 = vmatprep.subr.mxu0 0.0
          %383 = vmatpush1.msra.mxu0 0.0
          %384 = vmatprep.subr.mxu0 0.0
          %385 = vmatpush1.msra.mxu0 0.0
          %386 = vmatprep.subr.mxu0 0.0
          %387 = vmatpush1.msra.mxu0 0.0
          %388 = vmatprep.subr.mxu0 0.0
          %389 = vmatpush1.msra.mxu0 0.0
          %390 = vmatprep.subr.mxu0 0.0
          %391 = vmatpush1.msra.mxu0 0.0
          %392 = vmatprep.subr.mxu0 0.0
          %393 = vmatpush1.msra.mxu0 0.0
          %394 = vmatprep.subr.mxu0 0.0
          %395 = vmatpush1.msra.mxu0 0.0
          %396 = vmatprep.subr.mxu0 0.0
          %397 = vmatpush1.msra.mxu0 0.0
          %398 = vmatprep.subr.mxu0 0.0
          %399 = vmatpush1.msra.mxu0 0.0
          %400 = vmatprep.subr.mxu0 0.0
          %401 = vmatpush1.msra.mxu0 0.0
          %402 = vmatprep.subr.mxu0 0.0
          %403 = vmatpush1.msra.mxu0 0.0
          %404 = vmatprep.subr.mxu0 0.0
          %405 = vmatpush1.msra.mxu0 0.0
          %406 = vmatprep.subr.mxu0 0.0
          %407 = vmatpush1.msra.mxu0 0.0
          %408 = vmatprep.subr.mxu0 0.0
          %409 = vmatpush1.msra.mxu0 0.0
          %410 = vmatprep.subr.mxu0 0.0
          %411 = vmatpush1.msra.mxu0 0.0
          %412 = vmatprep.subr.mxu0 0.0
          %413 = vmatpush1.msra.mxu0 0.0
          %414 = vmatprep.subr.mxu0 0.0
          %415 = vmatpush1.msra.mxu0 0.0
          %416 = vmatprep.subr.mxu0 0.0
          %417 = vmatpush1.msra.mxu0 0.0
          %418 = vmatprep.mubr.f32.mxu0 0.0
          %419 = vmatmul.mubr.f32.gmra.mrb[0].mxu0 %v348
          %v420 = vpop.f32.mrb[0].mxu0
          %v421 = vadd.f32 0.0, %v420
          %v422 = vpop.f32.mrb[0].mxu0
          %423 = vdwg.mxu0
          %vm424 = vcmask 57344
          %425 = vst.msk [vmem:[#allocation2] sm:$0x1] %vm424, %v421
          %vm426 = vcmask 0
          %427 = vst.msk [vmem:[#allocation3] sm:$0x1] %vm426, -inf
          %428 = vst.msk [vmem:[#allocation4] sm:$0x1] %vm426, 0.0
          %vm429 = vcmask 24576
          %430 = vst.msk [vmem:[#allocation5] sm:$0x1] %vm429, 0.0
        $region52: #{tpu_custom_call.1} parent=43 // pred_fallthru
          _
        %v431 = vld [vmem:[%s5] sm:$0xff]
        %v432 = vld [vmem:[%s329] sm:$0x3]
        %vm433 = vcmask 15360
        %v435 = vsel %vm433, %v431, 0
        %vm437 = vcmask 1041408
        %v439 = vsel %vm437, %v432, 0
        %441 = vmatprep.subr.mxu0 0.0
        %442 = vmatpush1.msra.mxu0 %v439
        %443 = vmatprep.subr.mxu0 0.0
        %444 = vmatpush1.msra.mxu0 0.0
        %445 = vmatprep.subr.mxu0 0.0
        %446 = vmatpush1.msra.mxu0 0.0
        %447 = vmatprep.subr.mxu0 0.0
        %448 = vmatpush1.msra.mxu0 0.0
        %449 = vmatprep.subr.mxu0 0.0
        %450 = vmatpush1.msra.mxu0 0.0
        %451 = vmatprep.subr.mxu0 0.0
        %452 = vmatpush1.msra.mxu0 0.0
        %453 = vmatprep.subr.mxu0 0.0
        %454 = vmatpush1.msra.mxu0 0.0
        %455 = vmatprep.subr.mxu0 0.0
        %456 = vmatpush1.msra.mxu0 0.0
        %457 = vmatprep.subr.mxu0 0.0
        %458 = vmatpush1.msra.mxu0 0.0
        %459 = vmatprep.subr.mxu0 0.0
        %460 = vmatpush1.msra.mxu0 0.0
        %461 = vmatprep.subr.mxu0 0.0
        %462 = vmatpush1.msra.mxu0 0.0
        %463 = vmatprep.subr.mxu0 0.0
        %464 = vmatpush1.msra.mxu0 0.0
        %465 = vmatprep.subr.mxu0 0.0
        %466 = vmatpush1.msra.mxu0 0.0
        %467 = vmatprep.subr.mxu0 0.0
        %468 = vmatpush1.msra.mxu0 0.0
        %469 = vmatprep.subr.mxu0 0.0
        %470 = vmatpush1.msra.mxu0 0.0
        %471 = vmatprep.subr.mxu0 0.0
        %472 = vmatpush1.msra.mxu0 0.0
        %473 = vmatprep.subr.mxu0 0.0
        %474 = vmatpush1.msra.mxu0 0.0
        %475 = vmatprep.subr.mxu0 0.0
        %476 = vmatpush1.msra.mxu0 0.0
        %477 = vmatprep.subr.mxu0 0.0
        %478 = vmatpush1.msra.mxu0 0.0
        %479 = vmatprep.subr.mxu0 0.0
        %480 = vmatpush1.msra.mxu0 0.0
        %481 = vmatprep.subr.mxu0 0.0
        %482 = vmatpush1.msra.mxu0 0.0
        %483 = vmatprep.subr.mxu0 0.0
        %484 = vmatpush1.msra.mxu0 0.0
        %485 = vmatprep.subr.mxu0 0.0
        %486 = vmatpush1.msra.mxu0 0.0
        %487 = vmatprep.subr.mxu0 0.0
        %488 = vmatpush1.msra.mxu0 0.0
        %489 = vmatprep.subr.mxu0 0.0
        %490 = vmatpush1.msra.mxu0 0.0
        %491 = vmatprep.subr.mxu0 0.0
        %492 = vmatpush1.msra.mxu0 0.0
        %493 = vmatprep.subr.mxu0 0.0
        %494 = vmatpush1.msra.mxu0 0.0
        %495 = vmatprep.subr.mxu0 0.0
        %496 = vmatpush1.msra.mxu0 0.0
        %497 = vmatprep.subr.mxu0 0.0
        %498 = vmatpush1.msra.mxu0 0.0
        %499 = vmatprep.subr.mxu0 0.0
        %500 = vmatpush1.msra.mxu0 0.0
        %501 = vmatprep.subr.mxu0 0.0
        %502 = vmatpush1.msra.mxu0 0.0
        %503 = vmatprep.subr.mxu0 0.0
        %504 = vmatpush1.msra.mxu0 0.0
        %505 = vmatprep.mubr.f32.mxu0 0.0
        %506 = vmatmul.mubr.f32.gmra.mrb[0].mxu0 %v435
        %v507 = vpop.f32.mrb[0].mxu0
        %v508 = vadd.f32 0.0, %v507
        %v509 = vpop.f32.mrb[0].mxu0
        %510 = vdwg.mxu0
        %v511 = vld [vmem:[#allocation2] sm:$0x1]
        %s512 = sld [smem:[#allocation8]]
        %514 = vset.pattern.permute.xlu0 0
        %515 = vperm.xlu0 %514, %v511
        %v516 = vpop.permute.xlu0 %515
        %v518 = vlaneseq
        %v519 = vshrl.u32 %v518, 7
        %v520 = vsub.s32 0, %v519
        %v521 = vrot.slane %v516, %v520
        %v522 = vadd.f32 %v521, %v508
        %v523 = vtanh.pop %v522
        %v524 = vstv %s512
        %v525 = vmul.f32 %v524, %v523
        %v526 = vadd.f32 %v525, 0.0
        %s527 = sld [smem:[#allocation8 + $0x1]]
        %528 = vset.pattern.permute.xlu0 1
        %529 = vperm.xlu0 %528, %v511
        %v530 = vpop.permute.xlu0 %529
        %v532 = vlaneseq
        %v533 = vshrl.u32 %v532, 7
        %v534 = vsub.s32 0, %v533
        %v535 = vrot.slane %v530, %v534
        %v536 = vadd.f32 %v535, %v508
        %v537 = vtanh.pop %v536
        %v538 = vstv %s527
        %v539 = vmul.f32 %v538, %v537
        %v541 = vrot.slane %v539, 1
        %v543 = vadd.f32 %v526, %v541
        %s544 = sld [smem:[#allocation8 + $0x2]]
        %545 = vset.pattern.permute.xlu0 2
        %546 = vperm.xlu0 %545, %v511
        %v547 = vpop.permute.xlu0 %546
        %v549 = vlaneseq
        %v550 = vshrl.u32 %v549, 7
        %v551 = vsub.s32 0, %v550
        %v552 = vrot.slane %v547, %v551
        %v553 = vadd.f32 %v552, %v508
        %v554 = vtanh.pop %v553
        %v555 = vstv %s544
        %v556 = vmul.f32 %v555, %v554
        %v558 = vrot.slane %v556, 2
        %v560 = vadd.f32 %v543, %v558
        %s561 = sld [smem:[#allocation8 + $0x3]]
        %562 = vset.pattern.permute.xlu0 3
        %563 = vperm.xlu0 %562, %v511
        %v564 = vpop.permute.xlu0 %563
        %v566 = vlaneseq
        %v567 = vshrl.u32 %v566, 7
        %v568 = vsub.s32 0, %v567
        %v569 = vrot.slane %v564, %v568
        %v570 = vadd.f32 %v569, %v508
        %v571 = vtanh.pop %v570
        %v572 = vstv %s561
        %v573 = vmul.f32 %v572, %v571
        %v575 = vrot.slane %v573, 3
        %v577 = vadd.f32 %v560, %v575
        %s578 = sld [smem:[#allocation8 + $0x4]]
        %579 = vset.pattern.permute.xlu0 4
        %580 = vperm.xlu0 %579, %v511
        %v581 = vpop.permute.xlu0 %580
        %v583 = vlaneseq
        %v584 = vshrl.u32 %v583, 7
        %v585 = vsub.s32 0, %v584
        %v586 = vrot.slane %v581, %v585
        %v587 = vadd.f32 %v586, %v508
        %v588 = vtanh.pop %v587
        %v589 = vstv %s578
        %v590 = vmul.f32 %v589, %v588
        %v592 = vrot.slane %v590, 4
        %v594 = vadd.f32 %v577, %v592
        %s595 = sld [smem:[#allocation8 + $0x5]]
        %596 = vset.pattern.permute.xlu0 5
        %597 = vperm.xlu0 %596, %v511
        %v598 = vpop.permute.xlu0 %597
        %v600 = vlaneseq
        %v601 = vshrl.u32 %v600, 7
        %v602 = vsub.s32 0, %v601
        %v603 = vrot.slane %v598, %v602
        %v604 = vadd.f32 %v603, %v508
        %v605 = vtanh.pop %v604
        %v606 = vstv %s595
        %v607 = vmul.f32 %v606, %v605
        %v609 = vrot.slane %v607, 5
        %v611 = vadd.f32 %v594, %v609
        %s612 = sld [smem:[#allocation8 + $0x6]]
        %613 = vset.pattern.permute.xlu0 6
        %614 = vperm.xlu0 %613, %v511
        %v615 = vpop.permute.xlu0 %614
        %v617 = vlaneseq
        %v618 = vshrl.u32 %v617, 7
        %v619 = vsub.s32 0, %v618
        %v620 = vrot.slane %v615, %v619
        %v621 = vadd.f32 %v620, %v508
        %v622 = vtanh.pop %v621
        %v623 = vstv %s612
        %v624 = vmul.f32 %v623, %v622
        %v626 = vrot.slane %v624, 6
        %v628 = vadd.f32 %v611, %v626
        %s629 = sld [smem:[#allocation8 + $0x7]]
        %630 = vset.pattern.permute.xlu0 7
        %631 = vperm.xlu0 %630, %v511
        %v632 = vpop.permute.xlu0 %631
        %v634 = vlaneseq
        %v635 = vshrl.u32 %v634, 7
        %v636 = vsub.s32 0, %v635
        %v637 = vrot.slane %v632, %v636
        %v638 = vadd.f32 %v637, %v508
        %v639 = vtanh.pop %v638
        %v640 = vstv %s629
        %v641 = vmul.f32 %v640, %v639
        %v643 = vrot.slane %v641, 7
        %v645 = vadd.f32 %v628, %v643
        %s646 = sld [smem:[#allocation7 + %s32]]
        %s647 = smul.u32 %s33, 10
        %v648 = vlaneseq
        %v649 = vand.u32 %v648, 127
        %v650 = vstv %s647
        %v651 = vadd.s32 %v650, %v649
        %v652 = vstv %s646
        %vm653 = vcmp.lt.s32.totalorder %v651, %v652
        %v654 = vsel %vm653, %v645, -1000000.0
        %v655 = vld [vmem:[#allocation3] sm:$0x1]
        %vm656 = vcmask 73728
        %v657 = vsel %vm656, %v654, -inf
        %658 = vmax.xlane.f32.xlu0 %v657
        %v659 = vpop.xlane.xlu0 %658
        %v660 = vmax.f32 %v655, %v659
        %v661 = vsub.f32 %v655, %v660
        %v662 = vmul.f32 %v661, 1.442695
        %v663 = vpow.pop %v662
        %665 = vset.pattern.permute.xlu0 0
        %666 = vperm.xlu0 %665, %v660
        %v667 = vpop.permute.xlu0 %666
        %v669 = vlaneseq
        %v670 = vshrl.u32 %v669, 7
        %v671 = vsub.s32 0, %v670
        %v672 = vrot.slane %v667, %v671
        %v673 = vsub.f32 %v654, %v672
        %v674 = vmul.f32 %v673, 1.442695
        %v675 = vpow.pop %v674
        %v676 = vld [vmem:[%s338] sm:$0xff]
        %v677 = vld [vmem:[%s338 + $0x8] sm:$0x3]
        %v678 = vld [vmem:[#allocation4] sm:$0x1]
        %v679 = vmul.f32 %v663, %v678
        %v680 = vsel %vm656, %v675, 0.0
        %681 = vadd.xlane.f32.xlu0 %v680
        %v682 = vpop.xlane.xlu0 %681
        %v683 = vadd.f32 %v679, %v682
        %vm684 = vcmask 0
        %685 = vst.msk [vmem:[#allocation4] sm:$0x1] %vm684, %v683
        %v686 = vld [vmem:[#allocation5] sm:$0x1]
        %688 = vset.pattern.permute.xlu0 0
        %689 = vperm.xlu0 %688, %v663
        %v690 = vpop.permute.xlu0 %689
        %v692 = vlaneseq
        %v693 = vshrl.u32 %v692, 7
        %v694 = vsub.s32 0, %v693
        %v695 = vrot.slane %v690, %v694
        %v696 = vmul.f32 %v695, %v686
        %vm697 = vcmask 80896
        %v699 = vsel %vm697, %v675, 0
        %v702 = vsel %vm437, %v677, 0
        %704 = vmatprep.subr.mxu0 0.0
        %705 = vmatpush1.msra.mxu0 %v676
        %706 = vmatprep.subr.mxu0 0.0
        %707 = vmatpush1.msra.mxu0 %v702
        %708 = vmatprep.subr.mxu0 0.0
        %709 = vmatpush1.msra.mxu0 0.0
        %710 = vmatprep.subr.mxu0 0.0
        %711 = vmatpush1.msra.mxu0 0.0
        %712 = vmatprep.subr.mxu0 0.0
        %713 = vmatpush1.msra.mxu0 0.0
        %714 = vmatprep.subr.mxu0 0.0
        %715 = vmatpush1.msra.mxu0 0.0
        %716 = vmatprep.subr.mxu0 0.0
        %717 = vmatpush1.msra.mxu0 0.0
        %718 = vmatprep.subr.mxu0 0.0
        %719 = vmatpush1.msra.mxu0 0.0
        %720 = vmatprep.subr.mxu0 0.0
        %721 = vmatpush1.msra.mxu0 0.0
        %722 = vmatprep.subr.mxu0 0.0
        %723 = vmatpush1.msra.mxu0 0.0
        %724 = vmatprep.subr.mxu0 0.0
        %725 = vmatpush1.msra.mxu0 0.0
        %726 = vmatprep.subr.mxu0 0.0
        %727 = vmatpush1.msra.mxu0 0.0
        %728 = vmatprep.subr.mxu0 0.0
        %729 = vmatpush1.msra.mxu0 0.0
        %730 = vmatprep.subr.mxu0 0.0
        %731 = vmatpush1.msra.mxu0 0.0
        %732 = vmatprep.subr.mxu0 0.0
        %733 = vmatpush1.msra.mxu0 0.0
        %734 = vmatprep.subr.mxu0 0.0
        %735 = vmatpush1.msra.mxu0 0.0
        %736 = vmatprep.subr.mxu0 0.0
        %737 = vmatpush1.msra.mxu0 0.0
        %738 = vmatprep.subr.mxu0 0.0
        %739 = vmatpush1.msra.mxu0 0.0
        %740 = vmatprep.subr.mxu0 0.0
        %741 = vmatpush1.msra.mxu0 0.0
        %742 = vmatprep.subr.mxu0 0.0
        %743 = vmatpush1.msra.mxu0 0.0
        %744 = vmatprep.subr.mxu0 0.0
        %745 = vmatpush1.msra.mxu0 0.0
        %746 = vmatprep.subr.mxu0 0.0
        %747 = vmatpush1.msra.mxu0 0.0
        %748 = vmatprep.subr.mxu0 0.0
        %749 = vmatpush1.msra.mxu0 0.0
        %750 = vmatprep.subr.mxu0 0.0
        %751 = vmatpush1.msra.mxu0 0.0
        %752 = vmatprep.subr.mxu0 0.0
        %753 = vmatpush1.msra.mxu0 0.0
        %754 = vmatprep.subr.mxu0 0.0
        %755 = vmatpush1.msra.mxu0 0.0
        %756 = vmatprep.subr.mxu0 0.0
        %757 = vmatpush1.msra.mxu0 0.0
        %758 = vmatprep.subr.mxu0 0.0
        %759 = vmatpush1.msra.mxu0 0.0
        %760 = vmatprep.subr.mxu0 0.0
        %761 = vmatpush1.msra.mxu0 0.0
        %762 = vmatprep.subr.mxu0 0.0
        %763 = vmatpush1.msra.mxu0 0.0
        %764 = vmatprep.subr.mxu0 0.0
        %765 = vmatpush1.msra.mxu0 0.0
        %766 = vmatprep.subr.mxu0 0.0
        %767 = vmatpush1.msra.mxu0 0.0
        %768 = vmatprep.mubr.f32.mxu0 0.0
        %769 = vmatmul.mubr.f32.gmra.mrb[0].mxu0 %v699
        %v770 = vpop.f32.mrb[0].mxu0
        %v771 = vadd.f32 0.0, %v770
        %v772 = vpop.f32.mrb[0].mxu0
        %773 = vdwg.mxu0
        %v774 = vadd.f32 %v696, %v771
        %vm775 = vcmask 24576
        %776 = vst.msk [vmem:[#allocation5] sm:$0x1] %vm775, %v774
        %777 = vst.msk [vmem:[#allocation3] sm:$0x1] %vm684, %v660
        // Predicated region
        $region53: #{tpu_custom_call.1} parent=43 // pred_check
          %p778 = pneg %p340
        $region54: #{tpu_custom_call.1} parent=43 // pred_check_branch
          %780 = sbr.rel (%p778) target = $region56
        $region55: #{tpu_custom_call.1} parent=43 // pred_region
          %v781 = vld [vmem:[#allocation4] sm:$0x1]
          %v782 = vrcp.pop %v781
          %v783 = vld [vmem:[#allocation5] sm:$0x1]
          %785 = vset.pattern.permute.xlu0 0
          %786 = vperm.xlu0 %785, %v782
          %v787 = vpop.permute.xlu0 %786
          %v789 = vlaneseq
          %v790 = vshrl.u32 %v789, 7
          %v791 = vsub.s32 0, %v790
          %v792 = vrot.slane %v787, %v791
          %v793 = vmul.f32 %v783, %v792
          %794 = vst.msk [vmem:[%s319] sm:$0x1] %vm775, %v793
        $region56: #{tpu_custom_call.1} parent=43 // pred_fallthru
          _
        %s795 = sand.u32 %s193, 1
        %s796 = scalar_lea.sflag [#allocation9], %s795
        %s797 = sand.u32 %s193, 1
        %s798 = scalar_lea.vmem [#allocation11], %s797
        // Predicated region
        $region57: #{tpu_custom_call.1} parent=43 // pred_check
          %p799 = pneg %p203
        $region58: #{tpu_custom_call.1} parent=43 // pred_check_branch
          %801 = sbr.rel (%p799) target = $region60
        $region59: #{tpu_custom_call.1} parent=43 // pred_region
          %s803 = ssub.s32 16, 16
          %804 = vsyncadd %s796, %s803
          %s805 = smul.addr %s32, 16
          %s806 = scalar_lea.hbm %s7, %s805
          %s808 = sshll.u32 %s798, 4
          %s809 = int_to_ptr.vmem [resolvable:$true] %s808
          %811 = dma.vmem_to_hbm [thread:$0]  %s809, 16, %s806, %s796
        $region60: #{tpu_custom_call.1} parent=43 // pred_fallthru
          _
      $region44: #{tpu_custom_call.1} parent=5 // pred_fallthru
        _
      %p812 = scmp.le.s32.totalorder 2, %s23
      // Predicated region
      $region61: #{tpu_custom_call.1} parent=5 // pred_check
        %p813 = pneg %p812
      $region62: #{tpu_custom_call.1} parent=5 // pred_check_branch
        %815 = sbr.rel (%p813) target = $region64
      $region63: #{tpu_custom_call.1} parent=5 // pred_region
        %s816 = ssub.s32 %s23, 2
        // Predicated region
        $region65: #{tpu_custom_call.1} parent=63 // pred_check
          %p817 = pneg %p209
        $region66: #{tpu_custom_call.1} parent=63 // pred_check_branch
          %819 = sbr.rel (%p817) target = $region68
        $region67: #{tpu_custom_call.1} parent=63 // pred_region
          %s820 = sand.u32 %s194, 1
          %s821 = scalar_lea.sflag [#allocation9], %s820
          %s822 = sand.u32 %s194, 1
          %s823 = scalar_lea.vmem [#allocation11], %s822
          %824 = dma.done %s821, 16
        $region68: #{tpu_custom_call.1} parent=63 // pred_fallthru
          _
      $region64: #{tpu_custom_call.1} parent=5 // pred_fallthru
        _
    $region6: #{tpu_custom_call.1} parent=1 // loop_footer
      %s27 = sadd.s32 1, %s23
    $region7: #{tpu_custom_call.1} parent=1 // loop_footer_branch
      %22 = sbr.rel target = $region3
    $region8: #{tpu_custom_call.1} parent=1 // loop_exit
      _
    %825 = vsyncpa [#allocation9], 1
    %s826 = scalar_lea.sflag [#allocation9], 1
    %827 = vsyncpa %s826, 1
    %828 = vsyncpa [#allocation10], 1
    %s829 = scalar_lea.sflag [#allocation10], 1
    %830 = vsyncpa %s829, 1

</llo_original>
